<compile_context>
chip_gen: v7x
topology: tpu7x:2x2x1
jax: 0.10.0
libtpu: 0.0.40
codegen_flags: <defaults>
</compile_context>

<pallas_src>
import jax
import jax.numpy as jnp
from jax.experimental import pallas as pl
from jax.experimental.pallas import tpu as pltpu


def _round_up(n, m):
    return ((n + m - 1) // m) * m


def sfu_kernel(x_ref, f_ref, wx_ref, wf_ref, b_ref, o_ref):
    """One row-tile of the SFU forward pass.

    x_ref  : (tm, Din)        input rows (also the gating residual)
    f_ref  : (tm, Dfus)       fusion rows
    wx_ref : (Din,  2*Din)    fused [W_r; W_g]^T restricted to the x features
    wf_ref : (Dfus, 2*Din)    fused [W_r; W_g]^T restricted to the fusion features
    b_ref  : (1,    2*Din)    fused [b_r, b_g]
    o_ref  : (tm, Din)        output rows
    """
    x = x_ref[...]
    f = f_ref[...]

    # Fused pre-activation for both linears in a single (tm, 2*Din) slab:
    #   pre = [x | f] @ [W_r; W_g]^T + [b_r, b_g]
    pre = (
        jnp.dot(x, wx_ref[...], preferred_element_type=jnp.float32)
        + jnp.dot(f, wf_ref[...], preferred_element_type=jnp.float32)
        + b_ref[...]
    )

    din = o_ref.shape[-1]
    r = jnp.tanh(pre[:, :din])
    g = jax.nn.sigmoid(pre[:, din:])

    x_f32 = x.astype(jnp.float32)
    # o = g*r + (1-g)*x  ==  g*(r - x) + x
    o_ref[...] = (g * (r - x_f32) + x_f32).astype(o_ref.dtype)


def sfu_forward(x, fusions, w_r, b_r, w_g, b_g, *, tm=512):
    """x: (B, S, Din), fusions: (B, S, Dfus).
    w_r, w_g: (Din, Din+Dfus)  (PyTorch nn.Linear layout),  b_r, b_g: (Din,)
    Returns: (B, S, Din)
    """
    B, S, Din = x.shape
    Dfus = fusions.shape[-1]
    M = B * S

    # --- weight prep (layout plumbing, not the hot path) -------------------
    # Fused output dim: [r | g] -> (K, 2*Din), then split along K into the
    # x-feature block and the fusion-feature block so the kernel never needs
    # the HBM concat.
    w_fused_t = jnp.concatenate([w_r, w_g], axis=0).T      # (K, 2*Din)
    wx = w_fused_t[:Din]                                   # (Din,  2*Din)
    wf = w_fused_t[Din:]                                   # (Dfus, 2*Din)
    b = jnp.concatenate([b_r, b_g]).reshape(1, 2 * Din)    # (1, 2*Din)

    x2d = x.reshape(M, Din)
    f2d = fusions.reshape(M, Dfus)

    # --- row tiling ---------------------------------------------------------
    # Effective tile: at most tm, at least the (8-aligned) row count, so tiny
    # problems don't pay for a huge padded tile.
    tm_eff = min(tm, _round_up(M, 8))
    M_pad = _round_up(M, tm_eff)
    if M_pad != M:
        x2d = jnp.pad(x2d, ((0, M_pad - M), (0, 0)))
        f2d = jnp.pad(f2d, ((0, M_pad - M), (0, 0)))

    grid = (M_pad // tm_eff,)

    out = pl.pallas_call(
        sfu_kernel,
        out_shape=jax.ShapeDtypeStruct((M_pad, Din), x.dtype),
        grid_spec=pltpu.PrefetchScalarGridSpec(
            num_scalar_prefetch=0,
            grid=grid,
            in_specs=[
                pl.BlockSpec((tm_eff, Din), lambda i: (i, 0)),     # x rows
                pl.BlockSpec((tm_eff, Dfus), lambda i: (i, 0)),    # fusion rows
                pl.BlockSpec((Din, 2 * Din), lambda i: (0, 0)),    # W (x part, resident)
                pl.BlockSpec((Dfus, 2 * Din), lambda i: (0, 0)),   # W (fusion part, resident)
                pl.BlockSpec((1, 2 * Din), lambda i: (0, 0)),      # fused bias
            ],
            out_specs=pl.BlockSpec((tm_eff, Din), lambda i: (i, 0)),
        ),
        compiler_params=pltpu.CompilerParams(
            # Row axis is embarrassingly parallel -> megacore / 2-TC split.
            dimension_semantics=("parallel",),
        ),
    )(x2d, f2d, wx, wf, b)

    if M_pad != M:
        out = out[:M]
    return out.reshape(B, S, Din)


def sfu_reference(x, fusions, w_r, b_r, w_g, b_g):
    """Pure-JAX reference mirroring the PyTorch forward."""
    r_f = jnp.concatenate([x, fusions], axis=2)
    r = jnp.tanh(r_f @ w_r.T + b_r)
    g = jax.nn.sigmoid(r_f @ w_g.T + b_g)
    return g * r + (1.0 - g) * x


if __name__ == "__main__":
    B, S = 2, 8
    input_size, fusion_size = 32, 32

    key = jax.random.PRNGKey(0)
    kx, kf, kwr, kbr, kwg, kbg = jax.random.split(key, 6)

    x = jax.random.normal(kx, (B, S, input_size), dtype=jnp.float32)
    fusions = jax.random.normal(kf, (B, S, fusion_size), dtype=jnp.float32)

    # Deterministic parameter init (nn.Linear shapes: weight (out, in), bias (out,)).
    fan_in = input_size + fusion_size
    bound = 1.0 / (fan_in ** 0.5)
    w_r = jax.random.uniform(kwr, (input_size, fan_in), jnp.float32, -bound, bound)
    b_r = jax.random.uniform(kbr, (input_size,), jnp.float32, -bound, bound)
    w_g = jax.random.uniform(kwg, (input_size, fan_in), jnp.float32, -bound, bound)
    b_g = jax.random.uniform(kbg, (input_size,), jnp.float32, -bound, bound)

    out = sfu_forward(x, fusions, w_r, b_r, w_g, b_g)
    out = jax.block_until_ready(out)

    ref = sfu_reference(x, fusions, w_r, b_r, w_g, b_g)
    assert out.shape == (B, S, input_size)
    assert jnp.allclose(out, ref, atol=1e-5, rtol=1e-5), "mismatch vs reference"

    print("KERNEL_OK")
</pallas_src>

<mosaic_0001>
module attributes {stable_mosaic.version = 11 : i64} {
  func.func @sfu_kernel(%arg0: i32, %arg1: memref<16x32xf32, #tpu.memory_space<vmem>>, %arg2: memref<16x32xf32, #tpu.memory_space<vmem>>, %arg3: memref<32x64xf32, #tpu.memory_space<vmem>>, %arg4: memref<32x64xf32, #tpu.memory_space<vmem>>, %arg5: memref<1x64xf32, #tpu.memory_space<vmem>>, %arg6: memref<16x32xf32, #tpu.memory_space<vmem>>) attributes {dimension_semantics = [#tpu.dimension_semantics<parallel>], iteration_bounds = array<i64: 1>, scalar_prefetch = 0 : i64, scratch_operands = 0 : i64, tpu.core_type = #tpu.core_type<tc>, window_params = [{transform_indices = @transform_0, window_bounds = array<i64: 16, 32>}, {transform_indices = @transform_1, window_bounds = array<i64: 16, 32>}, {pipeline_mode = #tpu.pipeline_mode<synchronous>, transform_indices = @transform_2, window_bounds = array<i64: 32, 64>}, {pipeline_mode = #tpu.pipeline_mode<synchronous>, transform_indices = @transform_3, window_bounds = array<i64: 32, 64>}, {pipeline_mode = #tpu.pipeline_mode<synchronous>, transform_indices = @transform_4, window_bounds = array<i64: 1, 64>}, {transform_indices = @transform_5, window_bounds = array<i64: 16, 32>}]} {
    %c0 = arith.constant 0 : index
    %c0_0 = arith.constant 0 : index
    %0 = vector.load %arg1[%c0, %c0_0] : memref<16x32xf32, #tpu.memory_space<vmem>>, vector<16x32xf32>
    %c0_1 = arith.constant 0 : index
    %c0_2 = arith.constant 0 : index
    %1 = vector.load %arg2[%c0_1, %c0_2] : memref<16x32xf32, #tpu.memory_space<vmem>>, vector<16x32xf32>
    %c0_3 = arith.constant 0 : index
    %c0_4 = arith.constant 0 : index
    %2 = vector.load %arg3[%c0_3, %c0_4] : memref<32x64xf32, #tpu.memory_space<vmem>>, vector<32x64xf32>
    %cst = arith.constant dense<0.000000e+00> : vector<16x64xf32>
    %3 = tpu.matmul %0, %2, %cst {dimension_numbers = #tpu.dot_dimension_numbers<[1], [0], [0], [1], [0, 0, 1, 1], [], []>} : vector<16x32xf32>, vector<32x64xf32>, vector<16x64xf32> -> vector<16x64xf32>
    %c0_5 = arith.constant 0 : index
    %c0_6 = arith.constant 0 : index
    %4 = vector.load %arg4[%c0_5, %c0_6] : memref<32x64xf32, #tpu.memory_space<vmem>>, vector<32x64xf32>
    %cst_7 = arith.constant dense<0.000000e+00> : vector<16x64xf32>
    %5 = tpu.matmul %1, %4, %cst_7 {dimension_numbers = #tpu.dot_dimension_numbers<[1], [0], [0], [1], [0, 0, 1, 1], [], []>} : vector<16x32xf32>, vector<32x64xf32>, vector<16x64xf32> -> vector<16x64xf32>
    %6 = arith.addf %3, %5 : vector<16x64xf32>
    %c0_8 = arith.constant 0 : index
    %c0_9 = arith.constant 0 : index
    %7 = vector.load %arg5[%c0_8, %c0_9] : memref<1x64xf32, #tpu.memory_space<vmem>>, vector<1x64xf32>
    %8 = vector.broadcast %7 : vector<1x64xf32> to vector<16x64xf32>
    %9 = arith.addf %6, %8 : vector<16x64xf32>
    %10 = vector.extract_strided_slice %9 {offsets = [0, 0], sizes = [16, 32], strides = [1, 1]} : vector<16x64xf32> to vector<16x32xf32>
    %11 = math.tanh %10 : vector<16x32xf32>
    %12 = vector.extract_strided_slice %9 {offsets = [0, 32], sizes = [16, 32], strides = [1, 1]} : vector<16x64xf32> to vector<16x32xf32>
    %13 = arith.negf %12 : vector<16x32xf32>
    %14 = math.exp %13 : vector<16x32xf32>
    %cst_10 = arith.constant 1.000000e+00 : f32
    %15 = vector.broadcast %cst_10 : f32 to vector<16x32xf32>
    %16 = arith.addf %15, %14 : vector<16x32xf32>
    %17 = arith.divf %15, %16 : vector<16x32xf32>
    %18 = arith.subf %11, %0 : vector<16x32xf32>
    %19 = arith.mulf %17, %18 : vector<16x32xf32>
    %20 = arith.addf %19, %0 : vector<16x32xf32>
    %c0_11 = arith.constant 0 : index
    %c0_12 = arith.constant 0 : index
    %21 = vector.load %arg6[%c0_11, %c0_12] : memref<16x32xf32, #tpu.memory_space<vmem>>, vector<16x32xf32>
    tpu.vector_store %arg6[%c0_11, %c0_12], %20 {strides = array<i32>} : memref<16x32xf32, #tpu.memory_space<vmem>>, vector<16x32xf32>,
    return
  }
  func.func @transform_0(%arg0: i32) -> (i32, i32) {
    %c0_i32 = arith.constant 0 : i32
    %c0_i32_0 = arith.constant 0 : i32
    return %arg0, %c0_i32 : i32, i32
  }
  func.func @transform_1(%arg0: i32) -> (i32, i32) {
    %c0_i32 = arith.constant 0 : i32
    %c0_i32_0 = arith.constant 0 : i32
    return %arg0, %c0_i32 : i32, i32
  }
  func.func @transform_2(%arg0: i32) -> (i32, i32) {
    %c0_i32 = arith.constant 0 : i32
    %c0_i32_0 = arith.constant 0 : i32
    %c0_i32_1 = arith.constant 0 : i32
    return %c0_i32, %c0_i32_0 : i32, i32
  }
  func.func @transform_3(%arg0: i32) -> (i32, i32) {
    %c0_i32 = arith.constant 0 : i32
    %c0_i32_0 = arith.constant 0 : i32
    %c0_i32_1 = arith.constant 0 : i32
    return %c0_i32, %c0_i32_0 : i32, i32
  }
  func.func @transform_4(%arg0: i32) -> (i32, i32) {
    %c0_i32 = arith.constant 0 : i32
    %c0_i32_0 = arith.constant 0 : i32
    %c0_i32_1 = arith.constant 0 : i32
    return %c0_i32, %c0_i32_0 : i32, i32
  }
  func.func @transform_5(%arg0: i32) -> (i32, i32) {
    %c0_i32 = arith.constant 0 : i32
    %c0_i32_0 = arith.constant 0 : i32
    return %arg0, %c0_i32 : i32, i32
  }
}

</mosaic_0001>

<llo_original>
// kernel: tpu_custom_call.1
$region0: #{tpu_custom_call.1}
  #allocation0 [shape = 'u32[]', space=smem, size = 0x4, offset = 0x4, fixed_abs, tag = 'smem constant byte address 0x4 - core index']
  #allocation1 [shape = 'u32[144,128]{1,0:T(1,128)}', space=vmem, size = 0x12000, scoped, tag = 'internal scratch']
  %s0 = inlined_call_operand.hbm [shape: f32[16,32], index: 0, kind: input, shape index: {}]
  %s1 = inlined_call_operand.hbm [shape: f32[16,32], index: 1, kind: input, shape index: {}]
  %s2 = inlined_call_operand.hbm [shape: f32[32,64], index: 2, kind: input, shape index: {}]
  %s3 = inlined_call_operand.hbm [shape: f32[32,64], index: 3, kind: input, shape index: {}]
  %s4 = inlined_call_operand.vmem [shape: f32[1,64], index: 4, kind: input, shape index: {}]
  %s5 = inlined_call_operand.hbm [shape: f32[16,32], index: 5, kind: output, shape index: {}]
  %s6 = sld [smem:[#allocation0]]
  $region46: #{tpu_custom_call.1} parent=0
    _
  %s8 = ssub.s32 1, %s6
  %s9 = scalar_select 0, %s8, %s6
  $region1: #{tpu_custom_call.1} parent=0
    #allocation2 [shape = 'u8[8192]{0}', space=vmem, size = 0x2000, scoped, tag = 'input window, operand 0, single buffered']
    #allocation3 [shape = 's32[1]{0}', space=sflag, size = 0x4, scoped, tag = 'scoped memory for tpu_custom_call.1']
    #allocation4 [shape = 's32[1]{0}', space=sflag, size = 0x4, scoped, tag = 'scoped memory for tpu_custom_call.1']
    #allocation5 [shape = 'u8[8192]{0}', space=vmem, size = 0x2000, scoped, tag = 'input window, operand 1, single buffered']
    #allocation6 [shape = 's32[1]{0}', space=sflag, size = 0x4, scoped, tag = 'scoped memory for tpu_custom_call.1']
    #allocation7 [shape = 'u8[16384]{0}', space=vmem, size = 0x4000, scoped, tag = 'input window, operand 2, single buffered']
    #allocation8 [shape = 'u8[16384]{0}', space=vmem, size = 0x4000, scoped, tag = 'input window, operand 3, single buffered']
    #allocation9 [shape = 's32[1]{0}', space=sflag, size = 0x4, scoped, tag = 'scoped memory for tpu_custom_call.1']
    #allocation10 [shape = 'u8[8192]{0}', space=vmem, size = 0x2000, scoped, tag = 'output window, operand 0, single buffered']
    %10 = vsyncpa [#allocation3], 0
    %11 = vsyncpa [#allocation6], 0
    %12 = vsyncpa [#allocation9], 0
    %13 = vsyncpa [#allocation4], 0
    // Predicated region
    $region2: #{tpu_custom_call.1} parent=1 // pred_check
      _
    $region3: #{tpu_custom_call.1} parent=1 // pred_check_branch
      %15 = sbr.rel (0) target = $region5
    $region4: #{tpu_custom_call.1} parent=1 // pred_region
      %s17 = ssub.s32 256, 256
      %18 = vsyncadd [#allocation3], %s17
      %s19 = sshll.u32 [#allocation2], 4
      %s20 = int_to_ptr.vmem [resolvable:$true] %s19
      %25 = dma.hbm_to_vmem [thread:$0]  %s0, 256, %s20, [#allocation3], 128, 128, 8
    $region5: #{tpu_custom_call.1} parent=1 // pred_fallthru
      _
    // Predicated region
    $region6: #{tpu_custom_call.1} parent=1 // pred_check
      _
    $region7: #{tpu_custom_call.1} parent=1 // pred_check_branch
      %27 = sbr.rel (0) target = $region9
    $region8: #{tpu_custom_call.1} parent=1 // pred_region
      %s29 = ssub.s32 256, 256
      %30 = vsyncadd [#allocation6], %s29
      %s31 = sshll.u32 [#allocation5], 4
      %s32 = int_to_ptr.vmem [resolvable:$true] %s31
      %37 = dma.hbm_to_vmem [thread:$0]  %s1, 256, %s32, [#allocation6], 128, 128, 8
    $region9: #{tpu_custom_call.1} parent=1 // pred_fallthru
      _
    // Predicated region
    $region10: #{tpu_custom_call.1} parent=1 // pred_check
      _
    $region11: #{tpu_custom_call.1} parent=1 // pred_check_branch
      %39 = sbr.rel (0) target = $region13
    $region12: #{tpu_custom_call.1} parent=1 // pred_region
      %s41 = ssub.s32 512, 512
      %42 = vsyncadd [#allocation6], %s41
      %s43 = sshll.u32 [#allocation7], 4
      %s44 = int_to_ptr.vmem [resolvable:$true] %s43
      %49 = dma.hbm_to_vmem [thread:$0]  %s2, 512, %s44, [#allocation6], 128, 128, 8
    $region13: #{tpu_custom_call.1} parent=1 // pred_fallthru
      _
    // Predicated region
    $region14: #{tpu_custom_call.1} parent=1 // pred_check
      _
    $region15: #{tpu_custom_call.1} parent=1 // pred_check_branch
      %51 = sbr.rel (0) target = $region17
    $region16: #{tpu_custom_call.1} parent=1 // pred_region
      %s53 = ssub.s32 512, 512
      %54 = vsyncadd [#allocation9], %s53
      %s55 = sshll.u32 [#allocation8], 4
      %s56 = int_to_ptr.vmem [resolvable:$true] %s55
      %61 = dma.hbm_to_vmem [thread:$0]  %s3, 512, %s56, [#allocation9], 128, 128, 8
    $region17: #{tpu_custom_call.1} parent=1 // pred_fallthru
      _
    // Predicated region
    $region18: #{tpu_custom_call.1} parent=1 // pred_check
      _
    $region19: #{tpu_custom_call.1} parent=1 // pred_check_branch
      %63 = sbr.rel (0) target = $region21
    $region20: #{tpu_custom_call.1} parent=1 // pred_region
      _
    $region21: #{tpu_custom_call.1} parent=1 // pred_fallthru
      _
    // Predicated region
    $region22: #{tpu_custom_call.1} parent=1 // pred_check
      _
    $region23: #{tpu_custom_call.1} parent=1 // pred_check_branch
      %65 = sbr.rel (0) target = $region25
    $region24: #{tpu_custom_call.1} parent=1 // pred_region
      %66 = dma.done [#allocation3], 256
    $region25: #{tpu_custom_call.1} parent=1 // pred_fallthru
      _
    // Predicated region
    $region26: #{tpu_custom_call.1} parent=1 // pred_check
      _
    $region27: #{tpu_custom_call.1} parent=1 // pred_check_branch
      %68 = sbr.rel (0) target = $region29
    $region28: #{tpu_custom_call.1} parent=1 // pred_region
      %69 = dma.done [#allocation6], 256
    $region29: #{tpu_custom_call.1} parent=1 // pred_fallthru
      _
    // Predicated region
    $region30: #{tpu_custom_call.1} parent=1 // pred_check
      _
    $region31: #{tpu_custom_call.1} parent=1 // pred_check_branch
      %71 = sbr.rel (0) target = $region33
    $region32: #{tpu_custom_call.1} parent=1 // pred_region
      %72 = dma.done [#allocation6], 512
    $region33: #{tpu_custom_call.1} parent=1 // pred_fallthru
      _
    // Predicated region
    $region34: #{tpu_custom_call.1} parent=1 // pred_check
      _
    $region35: #{tpu_custom_call.1} parent=1 // pred_check_branch
      %74 = sbr.rel (0) target = $region37
    $region36: #{tpu_custom_call.1} parent=1 // pred_region
      %75 = dma.done [#allocation9], 512
    $region37: #{tpu_custom_call.1} parent=1 // pred_fallthru
      _
    %v76 = vld [vmem:[#allocation2] sm:$0xff]
    %v77 = vld [vmem:[#allocation2 + $0x8] sm:$0xff]
    %v78 = vld [vmem:[#allocation5] sm:$0xff]
    %v79 = vld [vmem:[#allocation5 + $0x8] sm:$0xff]
    %v80 = vld [vmem:[#allocation7] sm:$0xff]
    %v81 = vld [vmem:[#allocation7 + $0x8] sm:$0xff]
    %v82 = vld [vmem:[#allocation7 + $0x10] sm:$0xff]
    %v83 = vld [vmem:[#allocation7 + $0x18] sm:$0xff]
    %v84 = vld [vmem:[#allocation8] sm:$0xff]
    %v85 = vld [vmem:[#allocation8 + $0x8] sm:$0xff]
    %v86 = vld [vmem:[#allocation8 + $0x10] sm:$0xff]
    %v87 = vld [vmem:[#allocation8 + $0x18] sm:$0xff]
    %vm88 = vcmask 261120
    %v90 = vsel %vm88, %v78, 0
    %v93 = vsel %vm88, %v79, 0
    %95 = vmatprep.subr.mxu0 0.0
    %96 = vmatpush1.msra.mxu0 %v84
    %97 = vmatprep.subr.mxu0 0.0
    %98 = vmatpush1.msra.mxu0 %v85
    %99 = vmatprep.subr.mxu0 0.0
    %100 = vmatpush1.msra.mxu0 %v86
    %101 = vmatprep.subr.mxu0 0.0
    %102 = vmatpush1.msra.mxu0 %v87
    %103 = vmatprep.subr.mxu0 0.0
    %104 = vmatpush1.msra.mxu0 0.0
    %105 = vmatprep.subr.mxu0 0.0
    %106 = vmatpush1.msra.mxu0 0.0
    %107 = vmatprep.subr.mxu0 0.0
    %108 = vmatpush1.msra.mxu0 0.0
    %109 = vmatprep.subr.mxu0 0.0
    %110 = vmatpush1.msra.mxu0 0.0
    %111 = vmatprep.subr.mxu0 0.0
    %112 = vmatpush1.msra.mxu0 0.0
    %113 = vmatprep.subr.mxu0 0.0
    %114 = vmatpush1.msra.mxu0 0.0
    %115 = vmatprep.subr.mxu0 0.0
    %116 = vmatpush1.msra.mxu0 0.0
    %117 = vmatprep.subr.mxu0 0.0
    %118 = vmatpush1.msra.mxu0 0.0
    %119 = vmatprep.subr.mxu0 0.0
    %120 = vmatpush1.msra.mxu0 0.0
    %121 = vmatprep.subr.mxu0 0.0
    %122 = vmatpush1.msra.mxu0 0.0
    %123 = vmatprep.subr.mxu0 0.0
    %124 = vmatpush1.msra.mxu0 0.0
    %125 = vmatprep.subr.mxu0 0.0
    %126 = vmatpush1.msra.mxu0 0.0
    %127 = vmatprep.subr.mxu0 0.0
    %128 = vmatpush1.msra.mxu0 0.0
    %129 = vmatprep.subr.mxu0 0.0
    %130 = vmatpush1.msra.mxu0 0.0
    %131 = vmatprep.subr.mxu0 0.0
    %132 = vmatpush1.msra.mxu0 0.0
    %133 = vmatprep.subr.mxu0 0.0
    %134 = vmatpush1.msra.mxu0 0.0
    %135 = vmatprep.subr.mxu0 0.0
    %136 = vmatpush1.msra.mxu0 0.0
    %137 = vmatprep.subr.mxu0 0.0
    %138 = vmatpush1.msra.mxu0 0.0
    %139 = vmatprep.subr.mxu0 0.0
    %140 = vmatpush1.msra.mxu0 0.0
    %141 = vmatprep.subr.mxu0 0.0
    %142 = vmatpush1.msra.mxu0 0.0
    %143 = vmatprep.subr.mxu0 0.0
    %144 = vmatpush1.msra.mxu0 0.0
    %145 = vmatprep.subr.mxu0 0.0
    %146 = vmatpush1.msra.mxu0 0.0
    %147 = vmatprep.subr.mxu0 0.0
    %148 = vmatpush1.msra.mxu0 0.0
    %149 = vmatprep.subr.mxu0 0.0
    %150 = vmatpush1.msra.mxu0 0.0
    %151 = vmatprep.subr.mxu0 0.0
    %152 = vmatpush1.msra.mxu0 0.0
    %153 = vmatprep.subr.mxu0 0.0
    %154 = vmatpush1.msra.mxu0 0.0
    %155 = vmatprep.subr.mxu0 0.0
    %156 = vmatpush1.msra.mxu0 0.0
    %157 = vmatprep.subr.mxu0 0.0
    %158 = vmatpush1.msra.mxu0 0.0
    %159 = vmatprep.mubr.f32.mxu0 0.0
    %160 = vmatmul.mubr.f32.gmra.mrb[0].mxu0 %v90
    %v161 = vpop.f32.mrb[0].mxu0
    %v162 = vadd.f32 0.0, %v161
    %v163 = vpop.f32.mrb[0].mxu0
    %164 = vmatprep.mubr.f32.mxu0 0.0
    %165 = vmatmul.mubr.f32.gmra.mrb[0].mxu0 %v93
    %v166 = vpop.f32.mrb[0].mxu0
    %v167 = vadd.f32 0.0, %v166
    %v168 = vpop.f32.mrb[0].mxu0
    %169 = vdwg.mxu0
    %v171 = vsel %vm88, %v76, 0
    %v174 = vsel %vm88, %v77, 0
    %176 = vmatprep.subr.mxu0 0.0
    %177 = vmatpush1.msra.mxu0 %v80
    %178 = vmatprep.subr.mxu0 0.0
    %179 = vmatpush1.msra.mxu0 %v81
    %180 = vmatprep.subr.mxu0 0.0
    %181 = vmatpush1.msra.mxu0 %v82
    %182 = vmatprep.subr.mxu0 0.0
    %183 = vmatpush1.msra.mxu0 %v83
    %184 = vmatprep.subr.mxu0 0.0
    %185 = vmatpush1.msra.mxu0 0.0
    %186 = vmatprep.subr.mxu0 0.0
    %187 = vmatpush1.msra.mxu0 0.0
    %188 = vmatprep.subr.mxu0 0.0
    %189 = vmatpush1.msra.mxu0 0.0
    %190 = vmatprep.subr.mxu0 0.0
    %191 = vmatpush1.msra.mxu0 0.0
    %192 = vmatprep.subr.mxu0 0.0
    %193 = vmatpush1.msra.mxu0 0.0
    %194 = vmatprep.subr.mxu0 0.0
    %195 = vmatpush1.msra.mxu0 0.0
    %196 = vmatprep.subr.mxu0 0.0
    %197 = vmatpush1.msra.mxu0 0.0
    %198 = vmatprep.subr.mxu0 0.0
    %199 = vmatpush1.msra.mxu0 0.0
    %200 = vmatprep.subr.mxu0 0.0
    %201 = vmatpush1.msra.mxu0 0.0
    %202 = vmatprep.subr.mxu0 0.0
    %203 = vmatpush1.msra.mxu0 0.0
    %204 = vmatprep.subr.mxu0 0.0
    %205 = vmatpush1.msra.mxu0 0.0
    %206 = vmatprep.subr.mxu0 0.0
    %207 = vmatpush1.msra.mxu0 0.0
    %208 = vmatprep.subr.mxu0 0.0
    %209 = vmatpush1.msra.mxu0 0.0
    %210 = vmatprep.subr.mxu0 0.0
    %211 = vmatpush1.msra.mxu0 0.0
    %212 = vmatprep.subr.mxu0 0.0
    %213 = vmatpush1.msra.mxu0 0.0
    %214 = vmatprep.subr.mxu0 0.0
    %215 = vmatpush1.msra.mxu0 0.0
    %216 = vmatprep.subr.mxu0 0.0
    %217 = vmatpush1.msra.mxu0 0.0
    %218 = vmatprep.subr.mxu0 0.0
    %219 = vmatpush1.msra.mxu0 0.0
    %220 = vmatprep.subr.mxu0 0.0
    %221 = vmatpush1.msra.mxu0 0.0
    %222 = vmatprep.subr.mxu0 0.0
    %223 = vmatpush1.msra.mxu0 0.0
    %224 = vmatprep.subr.mxu0 0.0
    %225 = vmatpush1.msra.mxu0 0.0
    %226 = vmatprep.subr.mxu0 0.0
    %227 = vmatpush1.msra.mxu0 0.0
    %228 = vmatprep.subr.mxu0 0.0
    %229 = vmatpush1.msra.mxu0 0.0
    %230 = vmatprep.subr.mxu0 0.0
    %231 = vmatpush1.msra.mxu0 0.0
    %232 = vmatprep.subr.mxu0 0.0
    %233 = vmatpush1.msra.mxu0 0.0
    %234 = vmatprep.subr.mxu0 0.0
    %235 = vmatpush1.msra.mxu0 0.0
    %236 = vmatprep.subr.mxu0 0.0
    %237 = vmatpush1.msra.mxu0 0.0
    %238 = vmatprep.subr.mxu0 0.0
    %239 = vmatpush1.msra.mxu0 0.0
    %240 = vmatprep.mubr.f32.mxu0 0.0
    %241 = vmatmul.mubr.f32.gmra.mrb[0].mxu0 %v171
    %v242 = vpop.f32.mrb[0].mxu0
    %v243 = vadd.f32 %v162, %v242
    %v244 = vpop.f32.mrb[0].mxu0
    %245 = vmatprep.mubr.f32.mxu0 0.0
    %246 = vmatmul.mubr.f32.gmra.mrb[0].mxu0 %v174
    %v247 = vpop.f32.mrb[0].mxu0
    %v248 = vadd.f32 %v167, %v247
    %v249 = vpop.f32.mrb[0].mxu0
    %250 = vdwg.mxu0
    %v251 = vld [vmem:[%s4] sm:$0x1]
    %v253 = vlaneseq
    %v254 = vshrl.u32 %v253, 7
    %v255 = vsub.s32 0, %v254
    %v256 = vrot.slane %v251, %v255
    %v258 = vadd.f32 %v243, %v256
    %v259 = vadd.f32 %v248, %v256
    %v260 = vtanh.pop %v258
    %v261 = vtanh.pop %v259
    %v262 = vxor.u32 %v258, 2147483648
    %v263 = vxor.u32 %v259, 2147483648
    %v264 = vmul.f32 %v262, 1.442695
    %v265 = vpow.pop %v264
    %v266 = vmul.f32 %v263, 1.442695
    %v267 = vpow.pop %v266
    %v268 = vadd.f32 %v265, 1.0
    %v269 = vadd.f32 %v267, 1.0
    %v270 = vrcp.pop %v268
    %v271 = vmul.f32 1.0, %v270
    %v272 = vrcp.pop %v269
    %v273 = vmul.f32 1.0, %v272
    %v274 = vsub.f32 %v260, %v76
    %v275 = vsub.f32 %v261, %v77
    %278 = vrot.lane.b32.xlu0 %v274, 32
    %v279 = vpop.permute.xlu0 %278
    %280 = vrot.lane.b32.xlu0 %v275, 32
    %v281 = vpop.permute.xlu0 %280
    %v284 = vmul.f32 %v271, %v279
    %v285 = vmul.f32 %v273, %v281
    %286 = vrot.lane.b32.xlu0 %v76, 32
    %v287 = vpop.permute.xlu0 %286
    %288 = vrot.lane.b32.xlu0 %v77, 32
    %v289 = vpop.permute.xlu0 %288
    %v292 = vadd.f32 %v284, %v287
    %v293 = vadd.f32 %v285, %v289
    %296 = vrot.lane.b32.xlu0 %v292, 96
    %v297 = vpop.permute.xlu0 %296
    %298 = vrot.lane.b32.xlu0 %v293, 96
    %v299 = vpop.permute.xlu0 %298
    %302 = vst.msk [vmem:[#allocation10] sm:$0xff] %vm88, %v297
    %303 = vst.msk [vmem:[#allocation10 + $0x8] sm:$0xff] %vm88, %v299
    // Predicated region
    $region38: #{tpu_custom_call.1} parent=1 // pred_check
      _
    $region39: #{tpu_custom_call.1} parent=1 // pred_check_branch
      %305 = sbr.rel (0) target = $region41
    $region40: #{tpu_custom_call.1} parent=1 // pred_region
      %s307 = ssub.s32 256, 256
      %308 = vsyncadd [#allocation4], %s307
      %s309 = sshll.u32 [#allocation10], 4
      %s310 = int_to_ptr.vmem [resolvable:$true] %s309
      %315 = dma.vmem_to_hbm [thread:$0]  %s310, 256, %s5, [#allocation4], 128, 128, 8
    $region41: #{tpu_custom_call.1} parent=1 // pred_fallthru
      _
    // Predicated region
    $region42: #{tpu_custom_call.1} parent=1 // pred_check
      _
    $region43: #{tpu_custom_call.1} parent=1 // pred_check_branch
      %317 = sbr.rel (0) target = $region45
    $region44: #{tpu_custom_call.1} parent=1 // pred_region
      %318 = dma.done [#allocation4], 256
    $region45: #{tpu_custom_call.1} parent=1 // pred_fallthru
      _
    %319 = vsyncpa [#allocation3], 1
    %320 = vsyncpa [#allocation6], 1
    %321 = vsyncpa [#allocation9], 1
    %322 = vsyncpa [#allocation4], 1

</llo_original>
